<compile_context>
chip_gen: v7x
topology: tpu7x:2x2x1
jax: 0.10.0
libtpu: 0.0.40
codegen_flags: <defaults>
</compile_context>

<pallas_src>
import functools

import jax
import jax.numpy as jnp
from jax.experimental import pallas as pl
from jax.experimental.pallas import tpu as pltpu

N_LANES = 128      # pad the tiny N=12 output up to one full lane width
TB_MAX = 1024      # max batch-tile rows (fits the explicit VMEM budget below)
K_FEATURES = 2048
N_OUT = 12


def _round_down_8(n):
    return (n // 8) * 8


def _final_layer_kernel(x_ref, w_ref, b_ref, o_ref):
    # Feed the MXU bf16 operands (f32 accumulation) — keeps the kernel
    # HBM-bandwidth-bound on every generation instead of flipping to
    # MXU-bound f32 matmul on v7x.
    x_bf = x_ref[...].astype(jnp.bfloat16)
    w_bf = w_ref[...].astype(jnp.bfloat16)
    acc = jnp.dot(x_bf, w_bf, preferred_element_type=jnp.float32)
    o_ref[...] = jax.nn.sigmoid(acc + b_ref[...]).astype(o_ref.dtype)


def prepare_final_layer_params(w, b):
    """One-time (outside the per-call path): pad w:[K,N], b:[N] to lane-dense N."""
    K, N = w.shape
    assert b.shape == (N,)
    n_pad = (-N) % N_LANES
    w_p = jnp.pad(w, ((0, 0), (0, n_pad)))
    b_p = jnp.pad(b, (0, n_pad)).reshape(1, N + n_pad)
    return w_p, b_p


@functools.partial(jax.jit, static_argnames=("n_out",))
def final_layer_padded(x, w_p, b_p, n_out=N_OUT):
    """sigmoid(x @ w + b) with pre-padded (lane-dense) weight/bias.

    x: [B, K] f32, w_p: [K, Np] f32, b_p: [1, Np] f32, Np multiple of 128.
    Returns [B, n_out].
    """
    B, K = x.shape
    Kw, Np = w_p.shape
    assert K == Kw and b_p.shape == (1, Np) and Np % N_LANES == 0

    # Batch tile: multiple of 8 sublanes, >=2 grid steps when B allows
    # (v7x megacore), capped at TB_MAX. No padding of x: cdiv grid handles
    # the ragged last block (masked store for the overhang rows).
    tb = min(TB_MAX, max(8, _round_down_8(pl.cdiv(B, 2))))
    grid_b = pl.cdiv(B, tb)

    # Explicit VMEM budget: double-buffered x / weight / bias / out tiles.
    itemsize = 4  # f32 tiles in VMEM
    vmem_bytes = (2 * tb * K * itemsize      # x double-buffer
                  + 2 * K * Np * itemsize    # weight (resident, index_map const)
                  + 2 * Np * itemsize        # bias
                  + 2 * tb * Np * itemsize   # output double-buffer
                  + (4 << 20))               # headroom
    vmem_limit = int(min(max(vmem_bytes, 16 << 20), 48 << 20))

    out_p = pl.pallas_call(
        _final_layer_kernel,
        out_shape=jax.ShapeDtypeStruct((B, Np), x.dtype),
        grid_spec=pltpu.PrefetchScalarGridSpec(
            num_scalar_prefetch=0,
            grid=(grid_b,),
            in_specs=[
                pl.BlockSpec((tb, K), lambda i: (i, 0)),   # x batch tile
                pl.BlockSpec((K, Np), lambda i: (0, 0)),   # weight (resident)
                pl.BlockSpec((1, Np), lambda i: (0, 0)),   # bias (resident)
            ],
            out_specs=pl.BlockSpec((tb, Np), lambda i: (i, 0)),
        ),
        compiler_params=pltpu.CompilerParams(
            dimension_semantics=("parallel",),
            vmem_limit_bytes=vmem_limit,
        ),
    )(x, w_p, b_p)

    return out_p[:, :n_out]


def final_layer(x, w, b):
    """Convenience wrapper matching the original module: sigmoid(x @ w + b)."""
    w_p, b_p = prepare_final_layer_params(w, b)
    return final_layer_padded(x, w_p, b_p, n_out=w.shape[1])


if __name__ == "__main__":
    key = jax.random.PRNGKey(0)
    kx, kw, kb = jax.random.split(key, 3)

    B, K, N = 8, K_FEATURES, N_OUT
    x = jax.random.normal(kx, (B, K), dtype=jnp.float32)
    # Deterministic init mimicking nn.Linear's uniform(-1/sqrt(K), 1/sqrt(K)).
    bound = 1.0 / (K ** 0.5)
    w = jax.random.uniform(kw, (K, N), minval=-bound, maxval=bound,
                           dtype=jnp.float32)
    b = jax.random.uniform(kb, (N,), minval=-bound, maxval=bound,
                           dtype=jnp.float32)

    # Pad weight/bias once, outside the per-call path.
    w_p, b_p = prepare_final_layer_params(w, b)

    out = jax.block_until_ready(final_layer_padded(x, w_p, b_p))
    ref = jax.nn.sigmoid(x @ w + b)
    assert out.shape == (B, N)
    # bf16 MXU operands (f32 accumulate) -> loose-but-safe tolerance vs f32 ref.
    assert jnp.allclose(out, ref, atol=2e-2), float(jnp.max(jnp.abs(out - ref)))

    # Exercise the ragged-batch path (B not a multiple of the 8-row tile).
    B2 = 20
    x2 = jax.random.normal(kx, (B2, K), dtype=jnp.float32)
    out2 = jax.block_until_ready(final_layer_padded(x2, w_p, b_p))
    ref2 = jax.nn.sigmoid(x2 @ w + b)
    assert out2.shape == (B2, N)
    assert jnp.allclose(out2, ref2, atol=2e-2)

    print("KERNEL_OK")
</pallas_src>

<mosaic_0001>
module attributes {stable_mosaic.version = 11 : i64} {
  func.func @_final_layer_kernel(%arg0: i32, %arg1: memref<8x2048xf32, #tpu.memory_space<vmem>>, %arg2: memref<2048x128xf32, #tpu.memory_space<vmem>>, %arg3: memref<1x128xf32, #tpu.memory_space<vmem>>, %arg4: memref<8x128xf32, #tpu.memory_space<vmem>>) attributes {dimension_semantics = [#tpu.dimension_semantics<parallel>], iteration_bounds = array<i64: 1>, scalar_prefetch = 0 : i64, scratch_operands = 0 : i64, tpu.core_type = #tpu.core_type<tc>, window_params = [{transform_indices = @transform_0, window_bounds = array<i64: 8, 2048>}, {pipeline_mode = #tpu.pipeline_mode<synchronous>, transform_indices = @transform_1, window_bounds = array<i64: 2048, 128>}, {pipeline_mode = #tpu.pipeline_mode<synchronous>, transform_indices = @transform_2, window_bounds = array<i64: 1, 128>}, {transform_indices = @transform_3, window_bounds = array<i64: 8, 128>}]} {
    %c0 = arith.constant 0 : index
    %c0_0 = arith.constant 0 : index
    %0 = vector.load %arg1[%c0, %c0_0] : memref<8x2048xf32, #tpu.memory_space<vmem>>, vector<8x2048xf32>
    %1 = arith.truncf %0 : vector<8x2048xf32> to vector<8x2048xbf16>
    %c0_1 = arith.constant 0 : index
    %c0_2 = arith.constant 0 : index
    %2 = vector.load %arg2[%c0_1, %c0_2] : memref<2048x128xf32, #tpu.memory_space<vmem>>, vector<2048x128xf32>
    %3 = arith.truncf %2 : vector<2048x128xf32> to vector<2048x128xbf16>
    %cst = arith.constant dense<0.000000e+00> : vector<8x128xf32>
    %4 = tpu.matmul %1, %3, %cst {dimension_numbers = #tpu.dot_dimension_numbers<[1], [0], [0], [1], [0, 0, 1, 1], [], []>} : vector<8x2048xbf16>, vector<2048x128xbf16>, vector<8x128xf32> -> vector<8x128xf32>
    %c0_3 = arith.constant 0 : index
    %c0_4 = arith.constant 0 : index
    %5 = vector.load %arg3[%c0_3, %c0_4] : memref<1x128xf32, #tpu.memory_space<vmem>>, vector<1x128xf32>
    %6 = vector.broadcast %5 : vector<1x128xf32> to vector<8x128xf32>
    %7 = arith.addf %4, %6 : vector<8x128xf32>
    %8 = arith.negf %7 : vector<8x128xf32>
    %9 = math.exp %8 : vector<8x128xf32>
    %cst_5 = arith.constant 1.000000e+00 : f32
    %10 = vector.broadcast %cst_5 : f32 to vector<8x128xf32>
    %11 = arith.addf %10, %9 : vector<8x128xf32>
    %12 = arith.divf %10, %11 : vector<8x128xf32>
    %c0_6 = arith.constant 0 : index
    %c0_7 = arith.constant 0 : index
    %13 = vector.load %arg4[%c0_6, %c0_7] : memref<8x128xf32, #tpu.memory_space<vmem>>, vector<8x128xf32>
    tpu.vector_store %arg4[%c0_6, %c0_7], %12 {strides = array<i32>} : memref<8x128xf32, #tpu.memory_space<vmem>>, vector<8x128xf32>,
    return
  }
  func.func @transform_0(%arg0: i32) -> (i32, i32) {
    %c0_i32 = arith.constant 0 : i32
    %c0_i32_0 = arith.constant 0 : i32
    return %arg0, %c0_i32 : i32, i32
  }
  func.func @transform_1(%arg0: i32) -> (i32, i32) {
    %c0_i32 = arith.constant 0 : i32
    %c0_i32_0 = arith.constant 0 : i32
    %c0_i32_1 = arith.constant 0 : i32
    return %c0_i32, %c0_i32_0 : i32, i32
  }
  func.func @transform_2(%arg0: i32) -> (i32, i32) {
    %c0_i32 = arith.constant 0 : i32
    %c0_i32_0 = arith.constant 0 : i32
    %c0_i32_1 = arith.constant 0 : i32
    return %c0_i32, %c0_i32_0 : i32, i32
  }
  func.func @transform_3(%arg0: i32) -> (i32, i32) {
    %c0_i32 = arith.constant 0 : i32
    %c0_i32_0 = arith.constant 0 : i32
    return %arg0, %c0_i32 : i32, i32
  }
}

</mosaic_0001>

<llo_original>
// kernel: final_layer_padded.1
$region0: #{final_layer_padded.1}
  #allocation0 [shape = 'u32[]', space=smem, size = 0x4, offset = 0x4, fixed_abs, tag = 'smem constant byte address 0x4 - core index']
  #allocation1 [shape = 'u32[144,128]{1,0:T(1,128)}', space=vmem, size = 0x12000, scoped, tag = 'internal scratch']
  %s0 = inlined_call_operand.hbm [shape: f32[8,2048], index: 0, kind: input, shape index: {}]
  %s1 = inlined_call_operand.hbm [shape: f32[2048,128], index: 1, kind: input, shape index: {}]
  %s2 = inlined_call_operand.vmem [shape: f32[1,128], index: 2, kind: input, shape index: {}]
  %s3 = inlined_call_operand.hbm [shape: f32[8,128], index: 3, kind: output, shape index: {}]
  %s4 = sld [smem:[#allocation0]]
  $region30: #{final_layer_padded.1} parent=0
    _
  %s6 = ssub.s32 1, %s4
  %s7 = scalar_select 0, %s6, %s4
  $region1: #{final_layer_padded.1} parent=0
    #allocation2 [shape = 'u8[65536]{0}', space=vmem, size = 0x10000, scoped, tag = 'input window, operand 0, single buffered']
    #allocation3 [shape = 's32[1]{0}', space=sflag, size = 0x4, scoped, tag = 'scoped memory for final_layer_padded.1']
    #allocation4 [shape = 's32[1]{0}', space=sflag, size = 0x4, scoped, tag = 'scoped memory for final_layer_padded.1']
    #allocation5 [shape = 'u8[1048576]{0}', space=vmem, size = 0x100000, scoped, tag = 'input window, operand 1, single buffered']
    #allocation6 [shape = 's32[1]{0}', space=sflag, size = 0x4, scoped, tag = 'scoped memory for final_layer_padded.1']
    #allocation7 [shape = 'u8[4096]{0}', space=vmem, size = 0x1000, scoped, tag = 'output window, operand 0, single buffered']
    %8 = vsyncpa [#allocation3], 0
    %9 = vsyncpa [#allocation6], 0
    %10 = vsyncpa [#allocation4], 0
    // Predicated region
    $region2: #{final_layer_padded.1} parent=1 // pred_check
      _
    $region3: #{final_layer_padded.1} parent=1 // pred_check_branch
      %12 = sbr.rel (0) target = $region5
    $region4: #{final_layer_padded.1} parent=1 // pred_region
      %s14 = ssub.s32 2048, 2048
      %15 = vsyncadd [#allocation3], %s14
      %s17 = sshll.u32 [#allocation2], 4
      %s18 = int_to_ptr.vmem [resolvable:$true] %s17
      %20 = dma.hbm_to_vmem [thread:$0]  %s0, 2048, %s18, [#allocation3]
    $region5: #{final_layer_padded.1} parent=1 // pred_fallthru
      _
    // Predicated region
    $region6: #{final_layer_padded.1} parent=1 // pred_check
      _
    $region7: #{final_layer_padded.1} parent=1 // pred_check_branch
      %22 = sbr.rel (0) target = $region9
    $region8: #{final_layer_padded.1} parent=1 // pred_region
      %s24 = ssub.s32 32768, 32768
      %25 = vsyncadd [#allocation6], %s24
      %s26 = sshll.u32 [#allocation5], 4
      %s27 = int_to_ptr.vmem [resolvable:$true] %s26
      %32 = dma.hbm_to_vmem [thread:$0]  %s1, 32768, %s27, [#allocation6], 128, 128, 8
    $region9: #{final_layer_padded.1} parent=1 // pred_fallthru
      _
    // Predicated region
    $region10: #{final_layer_padded.1} parent=1 // pred_check
      _
    $region11: #{final_layer_padded.1} parent=1 // pred_check_branch
      %34 = sbr.rel (0) target = $region13
    $region12: #{final_layer_padded.1} parent=1 // pred_region
      _
    $region13: #{final_layer_padded.1} parent=1 // pred_fallthru
      _
    // Predicated region
    $region14: #{final_layer_padded.1} parent=1 // pred_check
      _
    $region15: #{final_layer_padded.1} parent=1 // pred_check_branch
      %36 = sbr.rel (0) target = $region17
    $region16: #{final_layer_padded.1} parent=1 // pred_region
      %37 = dma.done [#allocation3], 2048
    $region17: #{final_layer_padded.1} parent=1 // pred_fallthru
      _
    // Predicated region
    $region18: #{final_layer_padded.1} parent=1 // pred_check
      _
    $region19: #{final_layer_padded.1} parent=1 // pred_check_branch
      %39 = sbr.rel (0) target = $region21
    $region20: #{final_layer_padded.1} parent=1 // pred_region
      %40 = dma.done [#allocation6], 32768
    $region21: #{final_layer_padded.1} parent=1 // pred_fallthru
      _
    %v42 = vld [vmem:[#allocation2] sm:$0xff]
    %v43 = vld [vmem:[#allocation2 + $0x8] sm:$0xff]
    %v44 = vld [vmem:[#allocation2 + $0x10] sm:$0xff]
    %v45 = vld [vmem:[#allocation2 + $0x18] sm:$0xff]
    %v46 = vld [vmem:[#allocation2 + $0x20] sm:$0xff]
    %v47 = vld [vmem:[#allocation2 + $0x28] sm:$0xff]
    %v48 = vld [vmem:[#allocation2 + $0x30] sm:$0xff]
    %v49 = vld [vmem:[#allocation2 + $0x38] sm:$0xff]
    %v50 = vld [vmem:[#allocation2 + $0x40] sm:$0xff]
    %v51 = vld [vmem:[#allocation2 + $0x48] sm:$0xff]
    %v52 = vld [vmem:[#allocation2 + $0x50] sm:$0xff]
    %v53 = vld [vmem:[#allocation2 + $0x58] sm:$0xff]
    %v54 = vld [vmem:[#allocation2 + $0x60] sm:$0xff]
    %v55 = vld [vmem:[#allocation2 + $0x68] sm:$0xff]
    %v56 = vld [vmem:[#allocation2 + $0x70] sm:$0xff]
    %v57 = vld [vmem:[#allocation2 + $0x78] sm:$0xff]
    %v58 = vpack.c.bf16 %v42, %v42
    %v59 = vpack.c.bf16 %v43, %v43
    %v60 = vpack.c.bf16 %v44, %v44
    %v61 = vpack.c.bf16 %v45, %v45
    %v62 = vpack.c.bf16 %v46, %v46
    %v63 = vpack.c.bf16 %v47, %v47
    %v64 = vpack.c.bf16 %v48, %v48
    %v65 = vpack.c.bf16 %v49, %v49
    %v66 = vpack.c.bf16 %v50, %v50
    %v67 = vpack.c.bf16 %v51, %v51
    %v68 = vpack.c.bf16 %v52, %v52
    %v69 = vpack.c.bf16 %v53, %v53
    %v70 = vpack.c.bf16 %v54, %v54
    %v71 = vpack.c.bf16 %v55, %v55
    %v72 = vpack.c.bf16 %v56, %v56
    %v73 = vpack.c.bf16 %v57, %v57
    %v74 = vld [vmem:[#allocation5] sm:$0xff]
    %v75 = vld [vmem:[#allocation5 + $0x8] sm:$0xff]
    %v76 = vld [vmem:[#allocation5 + $0x10] sm:$0xff]
    %v77 = vld [vmem:[#allocation5 + $0x18] sm:$0xff]
    %v78 = vld [vmem:[#allocation5 + $0x20] sm:$0xff]
    %v79 = vld [vmem:[#allocation5 + $0x28] sm:$0xff]
    %v80 = vld [vmem:[#allocation5 + $0x30] sm:$0xff]
    %v81 = vld [vmem:[#allocation5 + $0x38] sm:$0xff]
    %v82 = vld [vmem:[#allocation5 + $0x40] sm:$0xff]
    %v83 = vld [vmem:[#allocation5 + $0x48] sm:$0xff]
    %v84 = vld [vmem:[#allocation5 + $0x50] sm:$0xff]
    %v85 = vld [vmem:[#allocation5 + $0x58] sm:$0xff]
    %v86 = vld [vmem:[#allocation5 + $0x60] sm:$0xff]
    %v87 = vld [vmem:[#allocation5 + $0x68] sm:$0xff]
    %v88 = vld [vmem:[#allocation5 + $0x70] sm:$0xff]
    %v89 = vld [vmem:[#allocation5 + $0x78] sm:$0xff]
    %v90 = vld [vmem:[#allocation5 + $0x80] sm:$0xff]
    %v91 = vld [vmem:[#allocation5 + $0x88] sm:$0xff]
    %v92 = vld [vmem:[#allocation5 + $0x90] sm:$0xff]
    %v93 = vld [vmem:[#allocation5 + $0x98] sm:$0xff]
    %v94 = vld [vmem:[#allocation5 + $0xa0] sm:$0xff]
    %v95 = vld [vmem:[#allocation5 + $0xa8] sm:$0xff]
    %v96 = vld [vmem:[#allocation5 + $0xb0] sm:$0xff]
    %v97 = vld [vmem:[#allocation5 + $0xb8] sm:$0xff]
    %v98 = vld [vmem:[#allocation5 + $0xc0] sm:$0xff]
    %v99 = vld [vmem:[#allocation5 + $0xc8] sm:$0xff]
    %v100 = vld [vmem:[#allocation5 + $0xd0] sm:$0xff]
    %v101 = vld [vmem:[#allocation5 + $0xd8] sm:$0xff]
    %v102 = vld [vmem:[#allocation5 + $0xe0] sm:$0xff]
    %v103 = vld [vmem:[#allocation5 + $0xe8] sm:$0xff]
    %v104 = vld [vmem:[#allocation5 + $0xf0] sm:$0xff]
    %v105 = vld [vmem:[#allocation5 + $0xf8] sm:$0xff]
    %v106 = vld [vmem:[#allocation5 + $0x100] sm:$0xff]
    %v107 = vld [vmem:[#allocation5 + $0x108] sm:$0xff]
    %v108 = vld [vmem:[#allocation5 + $0x110] sm:$0xff]
    %v109 = vld [vmem:[#allocation5 + $0x118] sm:$0xff]
    %v110 = vld [vmem:[#allocation5 + $0x120] sm:$0xff]
    %v111 = vld [vmem:[#allocation5 + $0x128] sm:$0xff]
    %v112 = vld [vmem:[#allocation5 + $0x130] sm:$0xff]
    %v113 = vld [vmem:[#allocation5 + $0x138] sm:$0xff]
    %v114 = vld [vmem:[#allocation5 + $0x140] sm:$0xff]
    %v115 = vld [vmem:[#allocation5 + $0x148] sm:$0xff]
    %v116 = vld [vmem:[#allocation5 + $0x150] sm:$0xff]
    %v117 = vld [vmem:[#allocation5 + $0x158] sm:$0xff]
    %v118 = vld [vmem:[#allocation5 + $0x160] sm:$0xff]
    %v119 = vld [vmem:[#allocation5 + $0x168] sm:$0xff]
    %v120 = vld [vmem:[#allocation5 + $0x170] sm:$0xff]
    %v121 = vld [vmem:[#allocation5 + $0x178] sm:$0xff]
    %v122 = vld [vmem:[#allocation5 + $0x180] sm:$0xff]
    %v123 = vld [vmem:[#allocation5 + $0x188] sm:$0xff]
    %v124 = vld [vmem:[#allocation5 + $0x190] sm:$0xff]
    %v125 = vld [vmem:[#allocation5 + $0x198] sm:$0xff]
    %v126 = vld [vmem:[#allocation5 + $0x1a0] sm:$0xff]
    %v127 = vld [vmem:[#allocation5 + $0x1a8] sm:$0xff]
    %v128 = vld [vmem:[#allocation5 + $0x1b0] sm:$0xff]
    %v129 = vld [vmem:[#allocation5 + $0x1b8] sm:$0xff]
    %v130 = vld [vmem:[#allocation5 + $0x1c0] sm:$0xff]
    %v131 = vld [vmem:[#allocation5 + $0x1c8] sm:$0xff]
    %v132 = vld [vmem:[#allocation5 + $0x1d0] sm:$0xff]
    %v133 = vld [vmem:[#allocation5 + $0x1d8] sm:$0xff]
    %v134 = vld [vmem:[#allocation5 + $0x1e0] sm:$0xff]
    %v135 = vld [vmem:[#allocation5 + $0x1e8] sm:$0xff]
    %v136 = vld [vmem:[#allocation5 + $0x1f0] sm:$0xff]
    %v137 = vld [vmem:[#allocation5 + $0x1f8] sm:$0xff]
    %v138 = vld [vmem:[#allocation5 + $0x200] sm:$0xff]
    %v139 = vld [vmem:[#allocation5 + $0x208] sm:$0xff]
    %v140 = vld [vmem:[#allocation5 + $0x210] sm:$0xff]
    %v141 = vld [vmem:[#allocation5 + $0x218] sm:$0xff]
    %v142 = vld [vmem:[#allocation5 + $0x220] sm:$0xff]
    %v143 = vld [vmem:[#allocation5 + $0x228] sm:$0xff]
    %v144 = vld [vmem:[#allocation5 + $0x230] sm:$0xff]
    %v145 = vld [vmem:[#allocation5 + $0x238] sm:$0xff]
    %v146 = vld [vmem:[#allocation5 + $0x240] sm:$0xff]
    %v147 = vld [vmem:[#allocation5 + $0x248] sm:$0xff]
    %v148 = vld [vmem:[#allocation5 + $0x250] sm:$0xff]
    %v149 = vld [vmem:[#allocation5 + $0x258] sm:$0xff]
    %v150 = vld [vmem:[#allocation5 + $0x260] sm:$0xff]
    %v151 = vld [vmem:[#allocation5 + $0x268] sm:$0xff]
    %v152 = vld [vmem:[#allocation5 + $0x270] sm:$0xff]
    %v153 = vld [vmem:[#allocation5 + $0x278] sm:$0xff]
    %v154 = vld [vmem:[#allocation5 + $0x280] sm:$0xff]
    %v155 = vld [vmem:[#allocation5 + $0x288] sm:$0xff]
    %v156 = vld [vmem:[#allocation5 + $0x290] sm:$0xff]
    %v157 = vld [vmem:[#allocation5 + $0x298] sm:$0xff]
    %v158 = vld [vmem:[#allocation5 + $0x2a0] sm:$0xff]
    %v159 = vld [vmem:[#allocation5 + $0x2a8] sm:$0xff]
    %v160 = vld [vmem:[#allocation5 + $0x2b0] sm:$0xff]
    %v161 = vld [vmem:[#allocation5 + $0x2b8] sm:$0xff]
    %v162 = vld [vmem:[#allocation5 + $0x2c0] sm:$0xff]
    %v163 = vld [vmem:[#allocation5 + $0x2c8] sm:$0xff]
    %v164 = vld [vmem:[#allocation5 + $0x2d0] sm:$0xff]
    %v165 = vld [vmem:[#allocation5 + $0x2d8] sm:$0xff]
    %v166 = vld [vmem:[#allocation5 + $0x2e0] sm:$0xff]
    %v167 = vld [vmem:[#allocation5 + $0x2e8] sm:$0xff]
    %v168 = vld [vmem:[#allocation5 + $0x2f0] sm:$0xff]
    %v169 = vld [vmem:[#allocation5 + $0x2f8] sm:$0xff]
    %v170 = vld [vmem:[#allocation5 + $0x300] sm:$0xff]
    %v171 = vld [vmem:[#allocation5 + $0x308] sm:$0xff]
    %v172 = vld [vmem:[#allocation5 + $0x310] sm:$0xff]
    %v173 = vld [vmem:[#allocation5 + $0x318] sm:$0xff]
    %v174 = vld [vmem:[#allocation5 + $0x320] sm:$0xff]
    %v175 = vld [vmem:[#allocation5 + $0x328] sm:$0xff]
    %v176 = vld [vmem:[#allocation5 + $0x330] sm:$0xff]
    %v177 = vld [vmem:[#allocation5 + $0x338] sm:$0xff]
    %v178 = vld [vmem:[#allocation5 + $0x340] sm:$0xff]
    %v179 = vld [vmem:[#allocation5 + $0x348] sm:$0xff]
    %v180 = vld [vmem:[#allocation5 + $0x350] sm:$0xff]
    %v181 = vld [vmem:[#allocation5 + $0x358] sm:$0xff]
    %v182 = vld [vmem:[#allocation5 + $0x360] sm:$0xff]
    %v183 = vld [vmem:[#allocation5 + $0x368] sm:$0xff]
    %v184 = vld [vmem:[#allocation5 + $0x370] sm:$0xff]
    %v185 = vld [vmem:[#allocation5 + $0x378] sm:$0xff]
    %v186 = vld [vmem:[#allocation5 + $0x380] sm:$0xff]
    %v187 = vld [vmem:[#allocation5 + $0x388] sm:$0xff]
    %v188 = vld [vmem:[#allocation5 + $0x390] sm:$0xff]
    %v189 = vld [vmem:[#allocation5 + $0x398] sm:$0xff]
    %v190 = vld [vmem:[#allocation5 + $0x3a0] sm:$0xff]
    %v191 = vld [vmem:[#allocation5 + $0x3a8] sm:$0xff]
    %v192 = vld [vmem:[#allocation5 + $0x3b0] sm:$0xff]
    %v193 = vld [vmem:[#allocation5 + $0x3b8] sm:$0xff]
    %v194 = vld [vmem:[#allocation5 + $0x3c0] sm:$0xff]
    %v195 = vld [vmem:[#allocation5 + $0x3c8] sm:$0xff]
    %v196 = vld [vmem:[#allocation5 + $0x3d0] sm:$0xff]
    %v197 = vld [vmem:[#allocation5 + $0x3d8] sm:$0xff]
    %v198 = vld [vmem:[#allocation5 + $0x3e0] sm:$0xff]
    %v199 = vld [vmem:[#allocation5 + $0x3e8] sm:$0xff]
    %v200 = vld [vmem:[#allocation5 + $0x3f0] sm:$0xff]
    %v201 = vld [vmem:[#allocation5 + $0x3f8] sm:$0xff]
    %v202 = vld [vmem:[#allocation5 + $0x400] sm:$0xff]
    %v203 = vld [vmem:[#allocation5 + $0x408] sm:$0xff]
    %v204 = vld [vmem:[#allocation5 + $0x410] sm:$0xff]
    %v205 = vld [vmem:[#allocation5 + $0x418] sm:$0xff]
    %v206 = vld [vmem:[#allocation5 + $0x420] sm:$0xff]
    %v207 = vld [vmem:[#allocation5 + $0x428] sm:$0xff]
    %v208 = vld [vmem:[#allocation5 + $0x430] sm:$0xff]
    %v209 = vld [vmem:[#allocation5 + $0x438] sm:$0xff]
    %v210 = vld [vmem:[#allocation5 + $0x440] sm:$0xff]
    %v211 = vld [vmem:[#allocation5 + $0x448] sm:$0xff]
    %v212 = vld [vmem:[#allocation5 + $0x450] sm:$0xff]
    %v213 = vld [vmem:[#allocation5 + $0x458] sm:$0xff]
    %v214 = vld [vmem:[#allocation5 + $0x460] sm:$0xff]
    %v215 = vld [vmem:[#allocation5 + $0x468] sm:$0xff]
    %v216 = vld [vmem:[#allocation5 + $0x470] sm:$0xff]
    %v217 = vld [vmem:[#allocation5 + $0x478] sm:$0xff]
    %v218 = vld [vmem:[#allocation5 + $0x480] sm:$0xff]
    %v219 = vld [vmem:[#allocation5 + $0x488] sm:$0xff]
    %v220 = vld [vmem:[#allocation5 + $0x490] sm:$0xff]
    %v221 = vld [vmem:[#allocation5 + $0x498] sm:$0xff]
    %v222 = vld [vmem:[#allocation5 + $0x4a0] sm:$0xff]
    %v223 = vld [vmem:[#allocation5 + $0x4a8] sm:$0xff]
    %v224 = vld [vmem:[#allocation5 + $0x4b0] sm:$0xff]
    %v225 = vld [vmem:[#allocation5 + $0x4b8] sm:$0xff]
    %v226 = vld [vmem:[#allocation5 + $0x4c0] sm:$0xff]
    %v227 = vld [vmem:[#allocation5 + $0x4c8] sm:$0xff]
    %v228 = vld [vmem:[#allocation5 + $0x4d0] sm:$0xff]
    %v229 = vld [vmem:[#allocation5 + $0x4d8] sm:$0xff]
    %v230 = vld [vmem:[#allocation5 + $0x4e0] sm:$0xff]
    %v231 = vld [vmem:[#allocation5 + $0x4e8] sm:$0xff]
    %v232 = vld [vmem:[#allocation5 + $0x4f0] sm:$0xff]
    %v233 = vld [vmem:[#allocation5 + $0x4f8] sm:$0xff]
    %v234 = vld [vmem:[#allocation5 + $0x500] sm:$0xff]
    %v235 = vld [vmem:[#allocation5 + $0x508] sm:$0xff]
    %v236 = vld [vmem:[#allocation5 + $0x510] sm:$0xff]
    %v237 = vld [vmem:[#allocation5 + $0x518] sm:$0xff]
    %v238 = vld [vmem:[#allocation5 + $0x520] sm:$0xff]
    %v239 = vld [vmem:[#allocation5 + $0x528] sm:$0xff]
    %v240 = vld [vmem:[#allocation5 + $0x530] sm:$0xff]
    %v241 = vld [vmem:[#allocation5 + $0x538] sm:$0xff]
    %v242 = vld [vmem:[#allocation5 + $0x540] sm:$0xff]
    %v243 = vld [vmem:[#allocation5 + $0x548] sm:$0xff]
    %v244 = vld [vmem:[#allocation5 + $0x550] sm:$0xff]
    %v245 = vld [vmem:[#allocation5 + $0x558] sm:$0xff]
    %v246 = vld [vmem:[#allocation5 + $0x560] sm:$0xff]
    %v247 = vld [vmem:[#allocation5 + $0x568] sm:$0xff]
    %v248 = vld [vmem:[#allocation5 + $0x570] sm:$0xff]
    %v249 = vld [vmem:[#allocation5 + $0x578] sm:$0xff]
    %v250 = vld [vmem:[#allocation5 + $0x580] sm:$0xff]
    %v251 = vld [vmem:[#allocation5 + $0x588] sm:$0xff]
    %v252 = vld [vmem:[#allocation5 + $0x590] sm:$0xff]
    %v253 = vld [vmem:[#allocation5 + $0x598] sm:$0xff]
    %v254 = vld [vmem:[#allocation5 + $0x5a0] sm:$0xff]
    %v255 = vld [vmem:[#allocation5 + $0x5a8] sm:$0xff]
    %v256 = vld [vmem:[#allocation5 + $0x5b0] sm:$0xff]
    %v257 = vld [vmem:[#allocation5 + $0x5b8] sm:$0xff]
    %v258 = vld [vmem:[#allocation5 + $0x5c0] sm:$0xff]
    %v259 = vld [vmem:[#allocation5 + $0x5c8] sm:$0xff]
    %v260 = vld [vmem:[#allocation5 + $0x5d0] sm:$0xff]
    %v261 = vld [vmem:[#allocation5 + $0x5d8] sm:$0xff]
    %v262 = vld [vmem:[#allocation5 + $0x5e0] sm:$0xff]
    %v263 = vld [vmem:[#allocation5 + $0x5e8] sm:$0xff]
    %v264 = vld [vmem:[#allocation5 + $0x5f0] sm:$0xff]
    %v265 = vld [vmem:[#allocation5 + $0x5f8] sm:$0xff]
    %v266 = vld [vmem:[#allocation5 + $0x600] sm:$0xff]
    %v267 = vld [vmem:[#allocation5 + $0x608] sm:$0xff]
    %v268 = vld [vmem:[#allocation5 + $0x610] sm:$0xff]
    %v269 = vld [vmem:[#allocation5 + $0x618] sm:$0xff]
    %v270 = vld [vmem:[#allocation5 + $0x620] sm:$0xff]
    %v271 = vld [vmem:[#allocation5 + $0x628] sm:$0xff]
    %v272 = vld [vmem:[#allocation5 + $0x630] sm:$0xff]
    %v273 = vld [vmem:[#allocation5 + $0x638] sm:$0xff]
    %v274 = vld [vmem:[#allocation5 + $0x640] sm:$0xff]
    %v275 = vld [vmem:[#allocation5 + $0x648] sm:$0xff]
    %v276 = vld [vmem:[#allocation5 + $0x650] sm:$0xff]
    %v277 = vld [vmem:[#allocation5 + $0x658] sm:$0xff]
    %v278 = vld [vmem:[#allocation5 + $0x660] sm:$0xff]
    %v279 = vld [vmem:[#allocation5 + $0x668] sm:$0xff]
    %v280 = vld [vmem:[#allocation5 + $0x670] sm:$0xff]
    %v281 = vld [vmem:[#allocation5 + $0x678] sm:$0xff]
    %v282 = vld [vmem:[#allocation5 + $0x680] sm:$0xff]
    %v283 = vld [vmem:[#allocation5 + $0x688] sm:$0xff]
    %v284 = vld [vmem:[#allocation5 + $0x690] sm:$0xff]
    %v285 = vld [vmem:[#allocation5 + $0x698] sm:$0xff]
    %v286 = vld [vmem:[#allocation5 + $0x6a0] sm:$0xff]
    %v287 = vld [vmem:[#allocation5 + $0x6a8] sm:$0xff]
    %v288 = vld [vmem:[#allocation5 + $0x6b0] sm:$0xff]
    %v289 = vld [vmem:[#allocation5 + $0x6b8] sm:$0xff]
    %v290 = vld [vmem:[#allocation5 + $0x6c0] sm:$0xff]
    %v291 = vld [vmem:[#allocation5 + $0x6c8] sm:$0xff]
    %v292 = vld [vmem:[#allocation5 + $0x6d0] sm:$0xff]
    %v293 = vld [vmem:[#allocation5 + $0x6d8] sm:$0xff]
    %v294 = vld [vmem:[#allocation5 + $0x6e0] sm:$0xff]
    %v295 = vld [vmem:[#allocation5 + $0x6e8] sm:$0xff]
    %v296 = vld [vmem:[#allocation5 + $0x6f0] sm:$0xff]
    %v297 = vld [vmem:[#allocation5 + $0x6f8] sm:$0xff]
    %v298 = vld [vmem:[#allocation5 + $0x700] sm:$0xff]
    %v299 = vld [vmem:[#allocation5 + $0x708] sm:$0xff]
    %v300 = vld [vmem:[#allocation5 + $0x710] sm:$0xff]
    %v301 = vld [vmem:[#allocation5 + $0x718] sm:$0xff]
    %v302 = vld [vmem:[#allocation5 + $0x720] sm:$0xff]
    %v303 = vld [vmem:[#allocation5 + $0x728] sm:$0xff]
    %v304 = vld [vmem:[#allocation5 + $0x730] sm:$0xff]
    %v305 = vld [vmem:[#allocation5 + $0x738] sm:$0xff]
    %v306 = vld [vmem:[#allocation5 + $0x740] sm:$0xff]
    %v307 = vld [vmem:[#allocation5 + $0x748] sm:$0xff]
    %v308 = vld [vmem:[#allocation5 + $0x750] sm:$0xff]
    %v309 = vld [vmem:[#allocation5 + $0x758] sm:$0xff]
    %v310 = vld [vmem:[#allocation5 + $0x760] sm:$0xff]
    %v311 = vld [vmem:[#allocation5 + $0x768] sm:$0xff]
    %v312 = vld [vmem:[#allocation5 + $0x770] sm:$0xff]
    %v313 = vld [vmem:[#allocation5 + $0x778] sm:$0xff]
    %v314 = vld [vmem:[#allocation5 + $0x780] sm:$0xff]
    %v315 = vld [vmem:[#allocation5 + $0x788] sm:$0xff]
    %v316 = vld [vmem:[#allocation5 + $0x790] sm:$0xff]
    %v317 = vld [vmem:[#allocation5 + $0x798] sm:$0xff]
    %v318 = vld [vmem:[#allocation5 + $0x7a0] sm:$0xff]
    %v319 = vld [vmem:[#allocation5 + $0x7a8] sm:$0xff]
    %v320 = vld [vmem:[#allocation5 + $0x7b0] sm:$0xff]
    %v321 = vld [vmem:[#allocation5 + $0x7b8] sm:$0xff]
    %v322 = vld [vmem:[#allocation5 + $0x7c0] sm:$0xff]
    %v323 = vld [vmem:[#allocation5 + $0x7c8] sm:$0xff]
    %v324 = vld [vmem:[#allocation5 + $0x7d0] sm:$0xff]
    %v325 = vld [vmem:[#allocation5 + $0x7d8] sm:$0xff]
    %v326 = vld [vmem:[#allocation5 + $0x7e0] sm:$0xff]
    %v327 = vld [vmem:[#allocation5 + $0x7e8] sm:$0xff]
    %v328 = vld [vmem:[#allocation5 + $0x7f0] sm:$0xff]
    %v329 = vld [vmem:[#allocation5 + $0x7f8] sm:$0xff]
    %v330 = vpack.c.bf16 %v75, %v74
    %v331 = vpack.c.bf16 %v77, %v76
    %v332 = vpack.c.bf16 %v79, %v78
    %v333 = vpack.c.bf16 %v81, %v80
    %v334 = vpack.c.bf16 %v83, %v82
    %v335 = vpack.c.bf16 %v85, %v84
    %v336 = vpack.c.bf16 %v87, %v86
    %v337 = vpack.c.bf16 %v89, %v88
    %v338 = vpack.c.bf16 %v91, %v90
    %v339 = vpack.c.bf16 %v93, %v92
    %v340 = vpack.c.bf16 %v95, %v94
    %v341 = vpack.c.bf16 %v97, %v96
    %v342 = vpack.c.bf16 %v99, %v98
    %v343 = vpack.c.bf16 %v101, %v100
    %v344 = vpack.c.bf16 %v103, %v102
    %v345 = vpack.c.bf16 %v105, %v104
    %v346 = vpack.c.bf16 %v107, %v106
    %v347 = vpack.c.bf16 %v109, %v108
    %v348 = vpack.c.bf16 %v111, %v110
    %v349 = vpack.c.bf16 %v113, %v112
    %v350 = vpack.c.bf16 %v115, %v114
    %v351 = vpack.c.bf16 %v117, %v116
    %v352 = vpack.c.bf16 %v119, %v118
    %v353 = vpack.c.bf16 %v121, %v120
    %v354 = vpack.c.bf16 %v123, %v122
    %v355 = vpack.c.bf16 %v125, %v124
    %v356 = vpack.c.bf16 %v127, %v126
    %v357 = vpack.c.bf16 %v129, %v128
    %v358 = vpack.c.bf16 %v131, %v130
    %v359 = vpack.c.bf16 %v133, %v132
    %v360 = vpack.c.bf16 %v135, %v134
    %v361 = vpack.c.bf16 %v137, %v136
    %v362 = vpack.c.bf16 %v139, %v138
    %v363 = vpack.c.bf16 %v141, %v140
    %v364 = vpack.c.bf16 %v143, %v142
    %v365 = vpack.c.bf16 %v145, %v144
    %v366 = vpack.c.bf16 %v147, %v146
    %v367 = vpack.c.bf16 %v149, %v148
    %v368 = vpack.c.bf16 %v151, %v150
    %v369 = vpack.c.bf16 %v153, %v152
    %v370 = vpack.c.bf16 %v155, %v154
    %v371 = vpack.c.bf16 %v157, %v156
    %v372 = vpack.c.bf16 %v159, %v158
    %v373 = vpack.c.bf16 %v161, %v160
    %v374 = vpack.c.bf16 %v163, %v162
    %v375 = vpack.c.bf16 %v165, %v164
    %v376 = vpack.c.bf16 %v167, %v166
    %v377 = vpack.c.bf16 %v169, %v168
    %v378 = vpack.c.bf16 %v171, %v170
    %v379 = vpack.c.bf16 %v173, %v172
    %v380 = vpack.c.bf16 %v175, %v174
    %v381 = vpack.c.bf16 %v177, %v176
    %v382 = vpack.c.bf16 %v179, %v178
    %v383 = vpack.c.bf16 %v181, %v180
    %v384 = vpack.c.bf16 %v183, %v182
    %v385 = vpack.c.bf16 %v185, %v184
    %v386 = vpack.c.bf16 %v187, %v186
    %v387 = vpack.c.bf16 %v189, %v188
    %v388 = vpack.c.bf16 %v191, %v190
    %v389 = vpack.c.bf16 %v193, %v192
    %v390 = vpack.c.bf16 %v195, %v194
    %v391 = vpack.c.bf16 %v197, %v196
    %v392 = vpack.c.bf16 %v199, %v198
    %v393 = vpack.c.bf16 %v201, %v200
    %v394 = vpack.c.bf16 %v203, %v202
    %v395 = vpack.c.bf16 %v205, %v204
    %v396 = vpack.c.bf16 %v207, %v206
    %v397 = vpack.c.bf16 %v209, %v208
    %v398 = vpack.c.bf16 %v211, %v210
    %v399 = vpack.c.bf16 %v213, %v212
    %v400 = vpack.c.bf16 %v215, %v214
    %v401 = vpack.c.bf16 %v217, %v216
    %v402 = vpack.c.bf16 %v219, %v218
    %v403 = vpack.c.bf16 %v221, %v220
    %v404 = vpack.c.bf16 %v223, %v222
    %v405 = vpack.c.bf16 %v225, %v224
    %v406 = vpack.c.bf16 %v227, %v226
    %v407 = vpack.c.bf16 %v229, %v228
    %v408 = vpack.c.bf16 %v231, %v230
    %v409 = vpack.c.bf16 %v233, %v232
    %v410 = vpack.c.bf16 %v235, %v234
    %v411 = vpack.c.bf16 %v237, %v236
    %v412 = vpack.c.bf16 %v239, %v238
    %v413 = vpack.c.bf16 %v241, %v240
    %v414 = vpack.c.bf16 %v243, %v242
    %v415 = vpack.c.bf16 %v245, %v244
    %v416 = vpack.c.bf16 %v247, %v246
    %v417 = vpack.c.bf16 %v249, %v248
    %v418 = vpack.c.bf16 %v251, %v250
    %v419 = vpack.c.bf16 %v253, %v252
    %v420 = vpack.c.bf16 %v255, %v254
    %v421 = vpack.c.bf16 %v257, %v256
    %v422 = vpack.c.bf16 %v259, %v258
    %v423 = vpack.c.bf16 %v261, %v260
    %v424 = vpack.c.bf16 %v263, %v262
    %v425 = vpack.c.bf16 %v265, %v264
    %v426 = vpack.c.bf16 %v267, %v266
    %v427 = vpack.c.bf16 %v269, %v268
    %v428 = vpack.c.bf16 %v271, %v270
    %v429 = vpack.c.bf16 %v273, %v272
    %v430 = vpack.c.bf16 %v275, %v274
    %v431 = vpack.c.bf16 %v277, %v276
    %v432 = vpack.c.bf16 %v279, %v278
    %v433 = vpack.c.bf16 %v281, %v280
    %v434 = vpack.c.bf16 %v283, %v282
    %v435 = vpack.c.bf16 %v285, %v284
    %v436 = vpack.c.bf16 %v287, %v286
    %v437 = vpack.c.bf16 %v289, %v288
    %v438 = vpack.c.bf16 %v291, %v290
    %v439 = vpack.c.bf16 %v293, %v292
    %v440 = vpack.c.bf16 %v295, %v294
    %v441 = vpack.c.bf16 %v297, %v296
    %v442 = vpack.c.bf16 %v299, %v298
    %v443 = vpack.c.bf16 %v301, %v300
    %v444 = vpack.c.bf16 %v303, %v302
    %v445 = vpack.c.bf16 %v305, %v304
    %v446 = vpack.c.bf16 %v307, %v306
    %v447 = vpack.c.bf16 %v309, %v308
    %v448 = vpack.c.bf16 %v311, %v310
    %v449 = vpack.c.bf16 %v313, %v312
    %v450 = vpack.c.bf16 %v315, %v314
    %v451 = vpack.c.bf16 %v317, %v316
    %v452 = vpack.c.bf16 %v319, %v318
    %v453 = vpack.c.bf16 %v321, %v320
    %v454 = vpack.c.bf16 %v323, %v322
    %v455 = vpack.c.bf16 %v325, %v324
    %v456 = vpack.c.bf16 %v327, %v326
    %v457 = vpack.c.bf16 %v329, %v328
    %v458 = vld [vmem:[%s2] sm:$0x1]
    %v460 = vlaneseq
    %v461 = vshrl.u32 %v460, 7
    %v462 = vsub.s32 0, %v461
    %v463 = vrot.slane %v458, %v462
    %465 = vmatprep.subr.bf16.mxu0 0
    %466 = vmatpush1.bf16.msra.mxu0 %v330
    %467 = vmatprep.subr.bf16.mxu0 0
    %468 = vmatpush1.bf16.msra.mxu0 %v331
    %469 = vmatprep.subr.bf16.mxu0 0
    %470 = vmatpush1.bf16.msra.mxu0 %v332
    %471 = vmatprep.subr.bf16.mxu0 0
    %472 = vmatpush1.bf16.msra.mxu0 %v333
    %473 = vmatprep.subr.bf16.mxu0 0
    %474 = vmatpush1.bf16.msra.mxu0 %v334
    %475 = vmatprep.subr.bf16.mxu0 0
    %476 = vmatpush1.bf16.msra.mxu0 %v335
    %477 = vmatprep.subr.bf16.mxu0 0
    %478 = vmatpush1.bf16.msra.mxu0 %v336
    %479 = vmatprep.subr.bf16.mxu0 0
    %480 = vmatpush1.bf16.msra.mxu0 %v337
    %481 = vmatprep.subr.bf16.mxu0 0
    %482 = vmatpush1.bf16.msra.mxu0 %v338
    %483 = vmatprep.subr.bf16.mxu0 0
    %484 = vmatpush1.bf16.msra.mxu0 %v339
    %485 = vmatprep.subr.bf16.mxu0 0
    %486 = vmatpush1.bf16.msra.mxu0 %v340
    %487 = vmatprep.subr.bf16.mxu0 0
    %488 = vmatpush1.bf16.msra.mxu0 %v341
    %489 = vmatprep.subr.bf16.mxu0 0
    %490 = vmatpush1.bf16.msra.mxu0 %v342
    %491 = vmatprep.subr.bf16.mxu0 0
    %492 = vmatpush1.bf16.msra.mxu0 %v343
    %493 = vmatprep.subr.bf16.mxu0 0
    %494 = vmatpush1.bf16.msra.mxu0 %v344
    %495 = vmatprep.subr.bf16.mxu0 0
    %496 = vmatpush1.bf16.msra.mxu0 %v345
    %497 = vmatprep.mubr.bf16.mxu0 %v59
    %498 = vmatmul.mubr.bf16.gmra.mrb[0].mxu0 %v58
    %v499 = vpop.f32.mrb[0].mxu0
    %v500 = vadd.f32 %v463, %v499
    %v501 = vpop.f32.mrb[0].mxu0
    %v502 = vpop.f32.mrb[0].mxu0
    %v503 = vpop.f32.mrb[0].mxu0
    %504 = vdwg.mxu0
    %505 = vmatprep.subr.bf16.mxu0 0
    %506 = vmatpush1.bf16.msra.mxu0 %v346
    %507 = vmatprep.subr.bf16.mxu0 0
    %508 = vmatpush1.bf16.msra.mxu0 %v347
    %509 = vmatprep.subr.bf16.mxu0 0
    %510 = vmatpush1.bf16.msra.mxu0 %v348
    %511 = vmatprep.subr.bf16.mxu0 0
    %512 = vmatpush1.bf16.msra.mxu0 %v349
    %513 = vmatprep.subr.bf16.mxu0 0
    %514 = vmatpush1.bf16.msra.mxu0 %v350
    %515 = vmatprep.subr.bf16.mxu0 0
    %516 = vmatpush1.bf16.msra.mxu0 %v351
    %517 = vmatprep.subr.bf16.mxu0 0
    %518 = vmatpush1.bf16.msra.mxu0 %v352
    %519 = vmatprep.subr.bf16.mxu0 0
    %520 = vmatpush1.bf16.msra.mxu0 %v353
    %521 = vmatprep.subr.bf16.mxu0 0
    %522 = vmatpush1.bf16.msra.mxu0 %v354
    %523 = vmatprep.subr.bf16.mxu0 0
    %524 = vmatpush1.bf16.msra.mxu0 %v355
    %525 = vmatprep.subr.bf16.mxu0 0
    %526 = vmatpush1.bf16.msra.mxu0 %v356
    %527 = vmatprep.subr.bf16.mxu0 0
    %528 = vmatpush1.bf16.msra.mxu0 %v357
    %529 = vmatprep.subr.bf16.mxu0 0
    %530 = vmatpush1.bf16.msra.mxu0 %v358
    %531 = vmatprep.subr.bf16.mxu0 0
    %532 = vmatpush1.bf16.msra.mxu0 %v359
    %533 = vmatprep.subr.bf16.mxu0 0
    %534 = vmatpush1.bf16.msra.mxu0 %v360
    %535 = vmatprep.subr.bf16.mxu0 0
    %536 = vmatpush1.bf16.msra.mxu0 %v361
    %537 = vmatprep.mubr.bf16.mxu0 %v61
    %538 = vmatmul.mubr.bf16.gmra.mrb[0].mxu0 %v60
    %v539 = vpop.f32.mrb[0].mxu0
    %v540 = vadd.f32 %v500, %v539
    %v541 = vpop.f32.mrb[0].mxu0
    %v542 = vpop.f32.mrb[0].mxu0
    %v543 = vpop.f32.mrb[0].mxu0
    %544 = vdwg.mxu0
    %545 = vmatprep.subr.bf16.mxu0 0
    %546 = vmatpush1.bf16.msra.mxu0 %v362
    %547 = vmatprep.subr.bf16.mxu0 0
    %548 = vmatpush1.bf16.msra.mxu0 %v363
    %549 = vmatprep.subr.bf16.mxu0 0
    %550 = vmatpush1.bf16.msra.mxu0 %v364
    %551 = vmatprep.subr.bf16.mxu0 0
    %552 = vmatpush1.bf16.msra.mxu0 %v365
    %553 = vmatprep.subr.bf16.mxu0 0
    %554 = vmatpush1.bf16.msra.mxu0 %v366
    %555 = vmatprep.subr.bf16.mxu0 0
    %556 = vmatpush1.bf16.msra.mxu0 %v367
    %557 = vmatprep.subr.bf16.mxu0 0
    %558 = vmatpush1.bf16.msra.mxu0 %v368
    %559 = vmatprep.subr.bf16.mxu0 0
    %560 = vmatpush1.bf16.msra.mxu0 %v369
    %561 = vmatprep.subr.bf16.mxu0 0
    %562 = vmatpush1.bf16.msra.mxu0 %v370
    %563 = vmatprep.subr.bf16.mxu0 0
    %564 = vmatpush1.bf16.msra.mxu0 %v371
    %565 = vmatprep.subr.bf16.mxu0 0
    %566 = vmatpush1.bf16.msra.mxu0 %v372
    %567 = vmatprep.subr.bf16.mxu0 0
    %568 = vmatpush1.bf16.msra.mxu0 %v373
    %569 = vmatprep.subr.bf16.mxu0 0
    %570 = vmatpush1.bf16.msra.mxu0 %v374
    %571 = vmatprep.subr.bf16.mxu0 0
    %572 = vmatpush1.bf16.msra.mxu0 %v375
    %573 = vmatprep.subr.bf16.mxu0 0
    %574 = vmatpush1.bf16.msra.mxu0 %v376
    %575 = vmatprep.subr.bf16.mxu0 0
    %576 = vmatpush1.bf16.msra.mxu0 %v377
    %577 = vmatprep.mubr.bf16.mxu0 %v63
    %578 = vmatmul.mubr.bf16.gmra.mrb[0].mxu0 %v62
    %v579 = vpop.f32.mrb[0].mxu0
    %v580 = vadd.f32 %v540, %v579
    %v581 = vpop.f32.mrb[0].mxu0
    %v582 = vpop.f32.mrb[0].mxu0
    %v583 = vpop.f32.mrb[0].mxu0
    %584 = vdwg.mxu0
    %585 = vmatprep.subr.bf16.mxu0 0
    %586 = vmatpush1.bf16.msra.mxu0 %v378
    %587 = vmatprep.subr.bf16.mxu0 0
    %588 = vmatpush1.bf16.msra.mxu0 %v379
    %589 = vmatprep.subr.bf16.mxu0 0
    %590 = vmatpush1.bf16.msra.mxu0 %v380
    %591 = vmatprep.subr.bf16.mxu0 0
    %592 = vmatpush1.bf16.msra.mxu0 %v381
    %593 = vmatprep.subr.bf16.mxu0 0
    %594 = vmatpush1.bf16.msra.mxu0 %v382
    %595 = vmatprep.subr.bf16.mxu0 0
    %596 = vmatpush1.bf16.msra.mxu0 %v383
    %597 = vmatprep.subr.bf16.mxu0 0
    %598 = vmatpush1.bf16.msra.mxu0 %v384
    %599 = vmatprep.subr.bf16.mxu0 0
    %600 = vmatpush1.bf16.msra.mxu0 %v385
    %601 = vmatprep.subr.bf16.mxu0 0
    %602 = vmatpush1.bf16.msra.mxu0 %v386
    %603 = vmatprep.subr.bf16.mxu0 0
    %604 = vmatpush1.bf16.msra.mxu0 %v387
    %605 = vmatprep.subr.bf16.mxu0 0
    %606 = vmatpush1.bf16.msra.mxu0 %v388
    %607 = vmatprep.subr.bf16.mxu0 0
    %608 = vmatpush1.bf16.msra.mxu0 %v389
    %609 = vmatprep.subr.bf16.mxu0 0
    %610 = vmatpush1.bf16.msra.mxu0 %v390
    %611 = vmatprep.subr.bf16.mxu0 0
    %612 = vmatpush1.bf16.msra.mxu0 %v391
    %613 = vmatprep.subr.bf16.mxu0 0
    %614 = vmatpush1.bf16.msra.mxu0 %v392
    %615 = vmatprep.subr.bf16.mxu0 0
    %616 = vmatpush1.bf16.msra.mxu0 %v393
    %617 = vmatprep.mubr.bf16.mxu0 %v65
    %618 = vmatmul.mubr.bf16.gmra.mrb[0].mxu0 %v64
    %v619 = vpop.f32.mrb[0].mxu0
    %v620 = vadd.f32 %v580, %v619
    %v621 = vpop.f32.mrb[0].mxu0
    %v622 = vpop.f32.mrb[0].mxu0
    %v623 = vpop.f32.mrb[0].mxu0
    %624 = vdwg.mxu0
    %625 = vmatprep.subr.bf16.mxu0 0
    %626 = vmatpush1.bf16.msra.mxu0 %v394
    %627 = vmatprep.subr.bf16.mxu0 0
    %628 = vmatpush1.bf16.msra.mxu0 %v395
    %629 = vmatprep.subr.bf16.mxu0 0
    %630 = vmatpush1.bf16.msra.mxu0 %v396
    %631 = vmatprep.subr.bf16.mxu0 0
    %632 = vmatpush1.bf16.msra.mxu0 %v397
    %633 = vmatprep.subr.bf16.mxu0 0
    %634 = vmatpush1.bf16.msra.mxu0 %v398
    %635 = vmatprep.subr.bf16.mxu0 0
    %636 = vmatpush1.bf16.msra.mxu0 %v399
    %637 = vmatprep.subr.bf16.mxu0 0
    %638 = vmatpush1.bf16.msra.mxu0 %v400
    %639 = vmatprep.subr.bf16.mxu0 0
    %640 = vmatpush1.bf16.msra.mxu0 %v401
    %641 = vmatprep.subr.bf16.mxu0 0
    %642 = vmatpush1.bf16.msra.mxu0 %v402
    %643 = vmatprep.subr.bf16.mxu0 0
    %644 = vmatpush1.bf16.msra.mxu0 %v403
    %645 = vmatprep.subr.bf16.mxu0 0
    %646 = vmatpush1.bf16.msra.mxu0 %v404
    %647 = vmatprep.subr.bf16.mxu0 0
    %648 = vmatpush1.bf16.msra.mxu0 %v405
    %649 = vmatprep.subr.bf16.mxu0 0
    %650 = vmatpush1.bf16.msra.mxu0 %v406
    %651 = vmatprep.subr.bf16.mxu0 0
    %652 = vmatpush1.bf16.msra.mxu0 %v407
    %653 = vmatprep.subr.bf16.mxu0 0
    %654 = vmatpush1.bf16.msra.mxu0 %v408
    %655 = vmatprep.subr.bf16.mxu0 0
    %656 = vmatpush1.bf16.msra.mxu0 %v409
    %657 = vmatprep.mubr.bf16.mxu0 %v67
    %658 = vmatmul.mubr.bf16.gmra.mrb[0].mxu0 %v66
    %v659 = vpop.f32.mrb[0].mxu0
    %v660 = vadd.f32 %v620, %v659
    %v661 = vpop.f32.mrb[0].mxu0
    %v662 = vpop.f32.mrb[0].mxu0
    %v663 = vpop.f32.mrb[0].mxu0
    %664 = vdwg.mxu0
    %665 = vmatprep.subr.bf16.mxu0 0
    %666 = vmatpush1.bf16.msra.mxu0 %v410
    %667 = vmatprep.subr.bf16.mxu0 0
    %668 = vmatpush1.bf16.msra.mxu0 %v411
    %669 = vmatprep.subr.bf16.mxu0 0
    %670 = vmatpush1.bf16.msra.mxu0 %v412
    %671 = vmatprep.subr.bf16.mxu0 0
    %672 = vmatpush1.bf16.msra.mxu0 %v413
    %673 = vmatprep.subr.bf16.mxu0 0
    %674 = vmatpush1.bf16.msra.mxu0 %v414
    %675 = vmatprep.subr.bf16.mxu0 0
    %676 = vmatpush1.bf16.msra.mxu0 %v415
    %677 = vmatprep.subr.bf16.mxu0 0
    %678 = vmatpush1.bf16.msra.mxu0 %v416
    %679 = vmatprep.subr.bf16.mxu0 0
    %680 = vmatpush1.bf16.msra.mxu0 %v417
    %681 = vmatprep.subr.bf16.mxu0 0
    %682 = vmatpush1.bf16.msra.mxu0 %v418
    %683 = vmatprep.subr.bf16.mxu0 0
    %684 = vmatpush1.bf16.msra.mxu0 %v419
    %685 = vmatprep.subr.bf16.mxu0 0
    %686 = vmatpush1.bf16.msra.mxu0 %v420
    %687 = vmatprep.subr.bf16.mxu0 0
    %688 = vmatpush1.bf16.msra.mxu0 %v421
    %689 = vmatprep.subr.bf16.mxu0 0
    %690 = vmatpush1.bf16.msra.mxu0 %v422
    %691 = vmatprep.subr.bf16.mxu0 0
    %692 = vmatpush1.bf16.msra.mxu0 %v423
    %693 = vmatprep.subr.bf16.mxu0 0
    %694 = vmatpush1.bf16.msra.mxu0 %v424
    %695 = vmatprep.subr.bf16.mxu0 0
    %696 = vmatpush1.bf16.msra.mxu0 %v425
    %697 = vmatprep.mubr.bf16.mxu0 %v69
    %698 = vmatmul.mubr.bf16.gmra.mrb[0].mxu0 %v68
    %v699 = vpop.f32.mrb[0].mxu0
    %v700 = vadd.f32 %v660, %v699
    %v701 = vpop.f32.mrb[0].mxu0
    %v702 = vpop.f32.mrb[0].mxu0
    %v703 = vpop.f32.mrb[0].mxu0
    %704 = vdwg.mxu0
    %705 = vmatprep.subr.bf16.mxu0 0
    %706 = vmatpush1.bf16.msra.mxu0 %v426
    %707 = vmatprep.subr.bf16.mxu0 0
    %708 = vmatpush1.bf16.msra.mxu0 %v427
    %709 = vmatprep.subr.bf16.mxu0 0
    %710 = vmatpush1.bf16.msra.mxu0 %v428
    %711 = vmatprep.subr.bf16.mxu0 0
    %712 = vmatpush1.bf16.msra.mxu0 %v429
    %713 = vmatprep.subr.bf16.mxu0 0
    %714 = vmatpush1.bf16.msra.mxu0 %v430
    %715 = vmatprep.subr.bf16.mxu0 0
    %716 = vmatpush1.bf16.msra.mxu0 %v431
    %717 = vmatprep.subr.bf16.mxu0 0
    %718 = vmatpush1.bf16.msra.mxu0 %v432
    %719 = vmatprep.subr.bf16.mxu0 0
    %720 = vmatpush1.bf16.msra.mxu0 %v433
    %721 = vmatprep.subr.bf16.mxu0 0
    %722 = vmatpush1.bf16.msra.mxu0 %v434
    %723 = vmatprep.subr.bf16.mxu0 0
    %724 = vmatpush1.bf16.msra.mxu0 %v435
    %725 = vmatprep.subr.bf16.mxu0 0
    %726 = vmatpush1.bf16.msra.mxu0 %v436
    %727 = vmatprep.subr.bf16.mxu0 0
    %728 = vmatpush1.bf16.msra.mxu0 %v437
    %729 = vmatprep.subr.bf16.mxu0 0
    %730 = vmatpush1.bf16.msra.mxu0 %v438
    %731 = vmatprep.subr.bf16.mxu0 0
    %732 = vmatpush1.bf16.msra.mxu0 %v439
    %733 = vmatprep.subr.bf16.mxu0 0
    %734 = vmatpush1.bf16.msra.mxu0 %v440
    %735 = vmatprep.subr.bf16.mxu0 0
    %736 = vmatpush1.bf16.msra.mxu0 %v441
    %737 = vmatprep.mubr.bf16.mxu0 %v71
    %738 = vmatmul.mubr.bf16.gmra.mrb[0].mxu0 %v70
    %v739 = vpop.f32.mrb[0].mxu0
    %v740 = vadd.f32 %v700, %v739
    %v741 = vpop.f32.mrb[0].mxu0
    %v742 = vpop.f32.mrb[0].mxu0
    %v743 = vpop.f32.mrb[0].mxu0
    %744 = vdwg.mxu0
    %745 = vmatprep.subr.bf16.mxu0 0
    %746 = vmatpush1.bf16.msra.mxu0 %v442
    %747 = vmatprep.subr.bf16.mxu0 0
    %748 = vmatpush1.bf16.msra.mxu0 %v443
    %749 = vmatprep.subr.bf16.mxu0 0
    %750 = vmatpush1.bf16.msra.mxu0 %v444
    %751 = vmatprep.subr.bf16.mxu0 0
    %752 = vmatpush1.bf16.msra.mxu0 %v445
    %753 = vmatprep.subr.bf16.mxu0 0
    %754 = vmatpush1.bf16.msra.mxu0 %v446
    %755 = vmatprep.subr.bf16.mxu0 0
    %756 = vmatpush1.bf16.msra.mxu0 %v447
    %757 = vmatprep.subr.bf16.mxu0 0
    %758 = vmatpush1.bf16.msra.mxu0 %v448
    %759 = vmatprep.subr.bf16.mxu0 0
    %760 = vmatpush1.bf16.msra.mxu0 %v449
    %761 = vmatprep.subr.bf16.mxu0 0
    %762 = vmatpush1.bf16.msra.mxu0 %v450
    %763 = vmatprep.subr.bf16.mxu0 0
    %764 = vmatpush1.bf16.msra.mxu0 %v451
    %765 = vmatprep.subr.bf16.mxu0 0
    %766 = vmatpush1.bf16.msra.mxu0 %v452
    %767 = vmatprep.subr.bf16.mxu0 0
    %768 = vmatpush1.bf16.msra.mxu0 %v453
    %769 = vmatprep.subr.bf16.mxu0 0
    %770 = vmatpush1.bf16.msra.mxu0 %v454
    %771 = vmatprep.subr.bf16.mxu0 0
    %772 = vmatpush1.bf16.msra.mxu0 %v455
    %773 = vmatprep.subr.bf16.mxu0 0
    %774 = vmatpush1.bf16.msra.mxu0 %v456
    %775 = vmatprep.subr.bf16.mxu0 0
    %776 = vmatpush1.bf16.msra.mxu0 %v457
    %777 = vmatprep.mubr.bf16.mxu0 %v73
    %778 = vmatmul.mubr.bf16.gmra.mrb[0].mxu0 %v72
    %v779 = vpop.f32.mrb[0].mxu0
    %v780 = vadd.f32 %v740, %v779
    %v781 = vpop.f32.mrb[0].mxu0
    %v782 = vpop.f32.mrb[0].mxu0
    %v783 = vpop.f32.mrb[0].mxu0
    %784 = vdwg.mxu0
    %v785 = vxor.u32 %v780, 2147483648
    %v786 = vmul.f32 %v785, 1.442695
    %v787 = vpow.pop %v786
    %v788 = vadd.f32 %v787, 1.0
    %v789 = vrcp.pop %v788
    %v790 = vmul.f32 1.0, %v789
    %791 = vst [vmem:[#allocation7] sm:$0xff] %v790
    // Predicated region
    $region22: #{final_layer_padded.1} parent=1 // pred_check
      _
    $region23: #{final_layer_padded.1} parent=1 // pred_check_branch
      %793 = sbr.rel (0) target = $region25
    $region24: #{final_layer_padded.1} parent=1 // pred_region
      %s795 = ssub.s32 128, 128
      %796 = vsyncadd [#allocation4], %s795
      %s798 = sshll.u32 [#allocation7], 4
      %s799 = int_to_ptr.vmem [resolvable:$true] %s798
      %801 = dma.vmem_to_hbm [thread:$0]  %s799, 128, %s3, [#allocation4]
    $region25: #{final_layer_padded.1} parent=1 // pred_fallthru
      _
    // Predicated region
    $region26: #{final_layer_padded.1} parent=1 // pred_check
      _
    $region27: #{final_layer_padded.1} parent=1 // pred_check_branch
      %803 = sbr.rel (0) target = $region29
    $region28: #{final_layer_padded.1} parent=1 // pred_region
      %804 = dma.done [#allocation4], 128
    $region29: #{final_layer_padded.1} parent=1 // pred_fallthru
      _
    %805 = vsyncpa [#allocation3], 1
    %806 = vsyncpa [#allocation6], 1
    %807 = vsyncpa [#allocation4], 1

</llo_original>
